<compile_context>
chip_gen: v7x
topology: tpu7x:2x2x1
jax: 0.10.0
libtpu: 0.0.40
codegen_flags: <defaults>
</compile_context>

<pallas_src>
import jax
import jax.numpy as jnp
from jax.experimental import pallas as pl
from jax.experimental.pallas import tpu as pltpu

LOG_SIG_MAX = 2.0
LOG_SIG_MIN = -20.0

LANE = 128        # lane width — pad output/hidden dims to multiples of this
TILE_B_CAP = 512  # max batch rows per grid step


def _round_up(n, m):
    return ((n + m - 1) // m) * m


def _choose_tile_b(B):
    """Adaptive batch tile: small batches stay small, large batches amortize
    per-step overhead, and (when there's enough work) the grid has >=2 steps
    so dimension_semantics=("parallel",) shards across v7x's two TensorCores."""
    b8 = _round_up(max(B, 1), 8)
    tile = min(TILE_B_CAP, b8)
    if b8 >= 64 and b8 <= tile:          # would otherwise be a single grid step
        tile = _round_up(pl.cdiv(b8, 2), 8)
    return tile


def _gaussian_policy_kernel(state_ref, w1_ref, b1_ref, w2_ref, b2_ref,
                            wh_ref, bh_ref, lo_ref, hi_ref, out_ref):
    # hidden layer 1: bf16 MXU matmul, f32 accumulate, f32 bias+relu on the VPU
    x = jnp.dot(state_ref[...].astype(jnp.bfloat16), w1_ref[...],
                preferred_element_type=jnp.float32) + b1_ref[...]
    x = jnp.maximum(x, 0.0)
    # hidden layer 2
    x = jnp.dot(x.astype(jnp.bfloat16), w2_ref[...],
                preferred_element_type=jnp.float32) + b2_ref[...]
    x = jnp.maximum(x, 0.0)
    # fused heads: lanes [0, A) = mean, lanes [A, 2A) = log_std, rest zero pad.
    y = jnp.dot(x.astype(jnp.bfloat16), wh_ref[...],
                preferred_element_type=jnp.float32) + bh_ref[...]
    # per-lane clamp: (-inf, +inf) on mean/pad lanes, (LOG_SIG_MIN, LOG_SIG_MAX)
    # on log_std lanes — replaces the old iota+where mask.
    out_ref[...] = jnp.minimum(jnp.maximum(y, lo_ref[...]), hi_ref[...])


def gaussian_policy_forward(state, packed_params, num_actions):
    """state: (B, num_inputs) -> (mean, log_std), each (B, num_actions) f32."""
    w1, b1, w2, b2, wh, bh, lo, hi = packed_params
    B, num_inputs = state.shape
    out_p = wh.shape[1]
    state = state.astype(jnp.float32)

    tile_b = _choose_tile_b(B)
    b_p = _round_up(max(B, 1), tile_b)
    if b_p != B:
        # rows only — the feature dim stays at its native width (no 8x DMA blowup)
        state = jnp.pad(state, ((0, b_p - B), (0, 0)))

    grid = (b_p // tile_b,)

    # weights/biases/clamp bounds: full-array blocks with constant index_map
    # -> DMA'd once, VMEM-resident across all grid steps.
    resident = lambda arr: pl.BlockSpec(arr.shape, lambda i: (0,) * arr.ndim)

    out = pl.pallas_call(
        _gaussian_policy_kernel,
        out_shape=jax.ShapeDtypeStruct((b_p, out_p), jnp.float32),
        grid=grid,
        in_specs=[
            # state tile: full (native) feature width as the last dim
            # (on v5e, add pipeline_mode=pl.Buffered(3) here if profiling shows
            #  exposed DMA at tile boundaries)
            pl.BlockSpec((tile_b, num_inputs), lambda i: (i, 0)),
            resident(w1), resident(b1),
            resident(w2), resident(b2),
            resident(wh), resident(bh),
            resident(lo), resident(hi),
        ],
        out_specs=pl.BlockSpec((tile_b, out_p), lambda i: (i, 0)),
        compiler_params=pltpu.CompilerParams(
            dimension_semantics=("parallel",),   # megacore-shard the batch on v7x
        ),
    )(state, w1, b1, w2, b2, wh, bh, lo, hi)

    mean = out[:B, :num_actions]
    log_std = out[:B, num_actions:2 * num_actions]
    return mean, log_std


def init_params(key, num_inputs, num_actions, hidden_dim):
    """Xavier-uniform weights (gain=1), zero biases — matches weights_init_.
    Returned in logical (unpadded) f32 form, stored as (in_features, out_features)."""
    def xavier(k, fan_in, fan_out):
        bound = jnp.sqrt(6.0 / (fan_in + fan_out))
        return jax.random.uniform(k, (fan_in, fan_out), jnp.float32,
                                  minval=-bound, maxval=bound)

    k1, k2, k3, k4 = jax.random.split(key, 4)
    w1 = xavier(k1, num_inputs, hidden_dim)
    b1 = jnp.zeros((1, hidden_dim), jnp.float32)
    w2 = xavier(k2, hidden_dim, hidden_dim)
    b2 = jnp.zeros((1, hidden_dim), jnp.float32)
    wm = xavier(k3, hidden_dim, num_actions)
    bm = jnp.zeros((1, num_actions), jnp.float32)
    ws = xavier(k4, hidden_dim, num_actions)
    bs = jnp.zeros((1, num_actions), jnp.float32)
    return (w1, b1, w2, b2, wm, bm, ws, bs)


def pack_params(params, num_inputs, num_actions, hidden_dim):
    """One-time packing: pad hidden/output dims, fuse the two heads, cast
    weights to bf16 (MXU-native), and build per-lane clamp-bound vectors.
    Biases and clamp bounds stay f32 (elementwise math is f32)."""
    w1, b1, w2, b2, wm, bm, ws, bs = params
    # 256-align the hidden dim for v6e/v7x's 2x256x256 MXU once it exceeds 128;
    # 128-alignment already fills v5e's 128x128 MXU.
    h_p = _round_up(hidden_dim, 256) if hidden_dim > 128 else _round_up(hidden_dim, 128)
    out_p = _round_up(2 * num_actions, LANE)

    bf16 = jnp.bfloat16
    # w1 keeps its native K = num_inputs so no state-feature padding is needed.
    w1p = jnp.zeros((num_inputs, h_p), jnp.float32).at[:, :hidden_dim].set(w1).astype(bf16)
    b1p = jnp.zeros((1, h_p), jnp.float32).at[:, :hidden_dim].set(b1)
    w2p = jnp.zeros((h_p, h_p), jnp.float32).at[:hidden_dim, :hidden_dim].set(w2).astype(bf16)
    b2p = jnp.zeros((1, h_p), jnp.float32).at[:, :hidden_dim].set(b2)

    # fused head: [ mean | log_std | zero pad ] along the lane axis
    whp = jnp.zeros((h_p, out_p), jnp.float32)
    whp = whp.at[:hidden_dim, :num_actions].set(wm)
    whp = whp.at[:hidden_dim, num_actions:2 * num_actions].set(ws)
    whp = whp.astype(bf16)
    bhp = jnp.zeros((1, out_p), jnp.float32)
    bhp = bhp.at[:, :num_actions].set(bm)
    bhp = bhp.at[:, num_actions:2 * num_actions].set(bs)

    # per-lane clamp bounds: only log_std lanes are clamped
    lo = jnp.full((1, out_p), -jnp.inf, jnp.float32)
    lo = lo.at[:, num_actions:2 * num_actions].set(LOG_SIG_MIN)
    hi = jnp.full((1, out_p), jnp.inf, jnp.float32)
    hi = hi.at[:, num_actions:2 * num_actions].set(LOG_SIG_MAX)

    return (w1p, b1p, w2p, b2p, whp, bhp, lo, hi)


if __name__ == "__main__":
    key = jax.random.PRNGKey(0)
    k_state, k_params = jax.random.split(key)

    B, num_inputs, num_actions, hidden_dim = 8, 16, 8, 32
    state = jax.random.normal(k_state, (B, num_inputs), jnp.float32)
    params = init_params(k_params, num_inputs, num_actions, hidden_dim)
    packed = pack_params(params, num_inputs, num_actions, hidden_dim)

    mean, log_std = gaussian_policy_forward(state, packed, num_actions)
    jax.block_until_ready((mean, log_std))
    assert mean.shape == (B, num_actions) and log_std.shape == (B, num_actions)

    w1, b1, w2, b2, wm, bm, ws, bs = params

    # Tight check: reference with bf16-rounded matmul inputs (same numerics as kernel)
    bf = lambda a: a.astype(jnp.bfloat16).astype(jnp.float32)
    x = jnp.maximum(bf(state) @ bf(w1) + b1, 0.0)
    x = jnp.maximum(bf(x) @ bf(w2) + b2, 0.0)
    mean_bf = bf(x) @ bf(wm) + bm
    log_std_bf = jnp.clip(bf(x) @ bf(ws) + bs, LOG_SIG_MIN, LOG_SIG_MAX)
    assert jnp.allclose(mean, mean_bf, atol=2e-3, rtol=2e-3), "mean mismatch (bf16 ref)"
    assert jnp.allclose(log_std, log_std_bf, atol=2e-3, rtol=2e-3), "log_std mismatch (bf16 ref)"

    # Loose check: full-f32 PyTorch-equivalent reference (bf16 weights => ~1e-2 tol)
    xf = jnp.maximum(state @ w1 + b1, 0.0)
    xf = jnp.maximum(xf @ w2 + b2, 0.0)
    mean_f32 = xf @ wm + bm
    log_std_f32 = jnp.clip(xf @ ws + bs, LOG_SIG_MIN, LOG_SIG_MAX)
    assert jnp.allclose(mean, mean_f32, atol=5e-2, rtol=5e-2), "mean mismatch (f32 ref)"
    assert jnp.allclose(log_std, log_std_f32, atol=5e-2, rtol=5e-2), "log_std mismatch (f32 ref)"

    # TODO(synk): `sample()` (rsample + tanh-squash log-prob) is stochastic and
    # not part of the deterministic forward(); only forward() is implemented here.
    print("KERNEL_OK")
</pallas_src>

<mosaic_0001>
module attributes {stable_mosaic.version = 11 : i64} {
  func.func @_gaussian_policy_kernel(%arg0: i32, %arg1: memref<8x16xf32, #tpu.memory_space<vmem>>, %arg2: memref<16x128xbf16, #tpu.memory_space<vmem>>, %arg3: memref<1x128xf32, #tpu.memory_space<vmem>>, %arg4: memref<128x128xbf16, #tpu.memory_space<vmem>>, %arg5: memref<1x128xf32, #tpu.memory_space<vmem>>, %arg6: memref<128x128xbf16, #tpu.memory_space<vmem>>, %arg7: memref<1x128xf32, #tpu.memory_space<vmem>>, %arg8: memref<1x128xf32, #tpu.memory_space<vmem>>, %arg9: memref<1x128xf32, #tpu.memory_space<vmem>>, %arg10: memref<8x128xf32, #tpu.memory_space<vmem>>) attributes {dimension_semantics = [#tpu.dimension_semantics<parallel>], iteration_bounds = array<i64: 1>, scalar_prefetch = 0 : i64, scratch_operands = 0 : i64, tpu.core_type = #tpu.core_type<tc>, window_params = [{transform_indices = @transform_0, window_bounds = array<i64: 8, 16>}, {pipeline_mode = #tpu.pipeline_mode<synchronous>, transform_indices = @transform_1, window_bounds = array<i64: 16, 128>}, {pipeline_mode = #tpu.pipeline_mode<synchronous>, transform_indices = @transform_2, window_bounds = array<i64: 1, 128>}, {pipeline_mode = #tpu.pipeline_mode<synchronous>, transform_indices = @transform_3, window_bounds = array<i64: 128, 128>}, {pipeline_mode = #tpu.pipeline_mode<synchronous>, transform_indices = @transform_4, window_bounds = array<i64: 1, 128>}, {pipeline_mode = #tpu.pipeline_mode<synchronous>, transform_indices = @transform_5, window_bounds = array<i64: 128, 128>}, {pipeline_mode = #tpu.pipeline_mode<synchronous>, transform_indices = @transform_6, window_bounds = array<i64: 1, 128>}, {pipeline_mode = #tpu.pipeline_mode<synchronous>, transform_indices = @transform_7, window_bounds = array<i64: 1, 128>}, {pipeline_mode = #tpu.pipeline_mode<synchronous>, transform_indices = @transform_8, window_bounds = array<i64: 1, 128>}, {transform_indices = @transform_9, window_bounds = array<i64: 8, 128>}]} {
    %c0 = arith.constant 0 : index
    %c0_0 = arith.constant 0 : index
    %0 = vector.load %arg1[%c0, %c0_0] : memref<8x16xf32, #tpu.memory_space<vmem>>, vector<8x16xf32>
    %1 = arith.truncf %0 : vector<8x16xf32> to vector<8x16xbf16>
    %c0_1 = arith.constant 0 : index
    %c0_2 = arith.constant 0 : index
    %2 = vector.load %arg2[%c0_1, %c0_2] : memref<16x128xbf16, #tpu.memory_space<vmem>>, vector<16x128xbf16>
    %cst = arith.constant dense<0.000000e+00> : vector<8x128xf32>
    %3 = tpu.matmul %1, %2, %cst {dimension_numbers = #tpu.dot_dimension_numbers<[1], [0], [0], [1], [0, 0, 1, 1], [], []>} : vector<8x16xbf16>, vector<16x128xbf16>, vector<8x128xf32> -> vector<8x128xf32>
    %c0_3 = arith.constant 0 : index
    %c0_4 = arith.constant 0 : index
    %4 = vector.load %arg3[%c0_3, %c0_4] : memref<1x128xf32, #tpu.memory_space<vmem>>, vector<1x128xf32>
    %5 = vector.broadcast %4 : vector<1x128xf32> to vector<8x128xf32>
    %6 = arith.addf %3, %5 : vector<8x128xf32>
    %cst_5 = arith.constant 0.000000e+00 : f32
    %7 = vector.broadcast %cst_5 : f32 to vector<8x128xf32>
    %8 = arith.maximumf %6, %7 : vector<8x128xf32>
    %9 = arith.truncf %8 : vector<8x128xf32> to vector<8x128xbf16>
    %c0_6 = arith.constant 0 : index
    %c0_7 = arith.constant 0 : index
    %10 = vector.load %arg4[%c0_6, %c0_7] : memref<128x128xbf16, #tpu.memory_space<vmem>>, vector<128x128xbf16>
    %cst_8 = arith.constant dense<0.000000e+00> : vector<8x128xf32>
    %11 = tpu.matmul %9, %10, %cst_8 {dimension_numbers = #tpu.dot_dimension_numbers<[1], [0], [0], [1], [0, 0, 1, 1], [], []>} : vector<8x128xbf16>, vector<128x128xbf16>, vector<8x128xf32> -> vector<8x128xf32>
    %c0_9 = arith.constant 0 : index
    %c0_10 = arith.constant 0 : index
    %12 = vector.load %arg5[%c0_9, %c0_10] : memref<1x128xf32, #tpu.memory_space<vmem>>, vector<1x128xf32>
    %13 = vector.broadcast %12 : vector<1x128xf32> to vector<8x128xf32>
    %14 = arith.addf %11, %13 : vector<8x128xf32>
    %cst_11 = arith.constant 0.000000e+00 : f32
    %15 = vector.broadcast %cst_11 : f32 to vector<8x128xf32>
    %16 = arith.maximumf %14, %15 : vector<8x128xf32>
    %17 = arith.truncf %16 : vector<8x128xf32> to vector<8x128xbf16>
    %c0_12 = arith.constant 0 : index
    %c0_13 = arith.constant 0 : index
    %18 = vector.load %arg6[%c0_12, %c0_13] : memref<128x128xbf16, #tpu.memory_space<vmem>>, vector<128x128xbf16>
    %cst_14 = arith.constant dense<0.000000e+00> : vector<8x128xf32>
    %19 = tpu.matmul %17, %18, %cst_14 {dimension_numbers = #tpu.dot_dimension_numbers<[1], [0], [0], [1], [0, 0, 1, 1], [], []>} : vector<8x128xbf16>, vector<128x128xbf16>, vector<8x128xf32> -> vector<8x128xf32>
    %c0_15 = arith.constant 0 : index
    %c0_16 = arith.constant 0 : index
    %20 = vector.load %arg7[%c0_15, %c0_16] : memref<1x128xf32, #tpu.memory_space<vmem>>, vector<1x128xf32>
    %21 = vector.broadcast %20 : vector<1x128xf32> to vector<8x128xf32>
    %22 = arith.addf %19, %21 : vector<8x128xf32>
    %c0_17 = arith.constant 0 : index
    %c0_18 = arith.constant 0 : index
    %23 = vector.load %arg8[%c0_17, %c0_18] : memref<1x128xf32, #tpu.memory_space<vmem>>, vector<1x128xf32>
    %24 = vector.broadcast %23 : vector<1x128xf32> to vector<8x128xf32>
    %25 = arith.maximumf %22, %24 : vector<8x128xf32>
    %c0_19 = arith.constant 0 : index
    %c0_20 = arith.constant 0 : index
    %26 = vector.load %arg9[%c0_19, %c0_20] : memref<1x128xf32, #tpu.memory_space<vmem>>, vector<1x128xf32>
    %27 = vector.broadcast %26 : vector<1x128xf32> to vector<8x128xf32>
    %28 = arith.minimumf %25, %27 : vector<8x128xf32>
    %c0_21 = arith.constant 0 : index
    %c0_22 = arith.constant 0 : index
    %29 = vector.load %arg10[%c0_21, %c0_22] : memref<8x128xf32, #tpu.memory_space<vmem>>, vector<8x128xf32>
    tpu.vector_store %arg10[%c0_21, %c0_22], %28 {strides = array<i32>} : memref<8x128xf32, #tpu.memory_space<vmem>>, vector<8x128xf32>,
    return
  }
  func.func @transform_0(%arg0: i32) -> (i32, i32) {
    %c0_i32 = arith.constant 0 : i32
    %c0_i32_0 = arith.constant 0 : i32
    return %arg0, %c0_i32 : i32, i32
  }
  func.func @transform_1(%arg0: i32) -> (i32, i32) {
    %c0_i32 = arith.constant 0 : i32
    %c0_i32_0 = arith.constant 0 : i32
    %c0_i32_1 = arith.constant 0 : i32
    return %c0_i32, %c0_i32_0 : i32, i32
  }
  func.func @transform_2(%arg0: i32) -> (i32, i32) {
    %c0_i32 = arith.constant 0 : i32
    %c0_i32_0 = arith.constant 0 : i32
    %c0_i32_1 = arith.constant 0 : i32
    return %c0_i32, %c0_i32_0 : i32, i32
  }
  func.func @transform_3(%arg0: i32) -> (i32, i32) {
    %c0_i32 = arith.constant 0 : i32
    %c0_i32_0 = arith.constant 0 : i32
    %c0_i32_1 = arith.constant 0 : i32
    return %c0_i32, %c0_i32_0 : i32, i32
  }
  func.func @transform_4(%arg0: i32) -> (i32, i32) {
    %c0_i32 = arith.constant 0 : i32
    %c0_i32_0 = arith.constant 0 : i32
    %c0_i32_1 = arith.constant 0 : i32
    return %c0_i32, %c0_i32_0 : i32, i32
  }
  func.func @transform_5(%arg0: i32) -> (i32, i32) {
    %c0_i32 = arith.constant 0 : i32
    %c0_i32_0 = arith.constant 0 : i32
    %c0_i32_1 = arith.constant 0 : i32
    return %c0_i32, %c0_i32_0 : i32, i32
  }
  func.func @transform_6(%arg0: i32) -> (i32, i32) {
    %c0_i32 = arith.constant 0 : i32
    %c0_i32_0 = arith.constant 0 : i32
    %c0_i32_1 = arith.constant 0 : i32
    return %c0_i32, %c0_i32_0 : i32, i32
  }
  func.func @transform_7(%arg0: i32) -> (i32, i32) {
    %c0_i32 = arith.constant 0 : i32
    %c0_i32_0 = arith.constant 0 : i32
    %c0_i32_1 = arith.constant 0 : i32
    return %c0_i32, %c0_i32_0 : i32, i32
  }
  func.func @transform_8(%arg0: i32) -> (i32, i32) {
    %c0_i32 = arith.constant 0 : i32
    %c0_i32_0 = arith.constant 0 : i32
    %c0_i32_1 = arith.constant 0 : i32
    return %c0_i32, %c0_i32_0 : i32, i32
  }
  func.func @transform_9(%arg0: i32) -> (i32, i32) {
    %c0_i32 = arith.constant 0 : i32
    %c0_i32_0 = arith.constant 0 : i32
    return %arg0, %c0_i32 : i32, i32
  }
}

</mosaic_0001>

<llo_original>
// kernel: tpu_custom_call.1
$region0: #{tpu_custom_call.1}
  #allocation0 [shape = 'u32[]', space=smem, size = 0x4, offset = 0x4, fixed_abs, tag = 'smem constant byte address 0x4 - core index']
  #allocation1 [shape = 'u32[144,128]{1,0:T(1,128)}', space=vmem, size = 0x12000, scoped, tag = 'internal scratch']
  %s0 = inlined_call_operand.hbm [shape: f32[8,16], index: 0, kind: input, shape index: {}]
  %s1 = inlined_call_operand.hbm [shape: bf16[16,128], index: 1, kind: input, shape index: {}]
  %s2 = inlined_call_operand.vmem [shape: f32[1,128], index: 2, kind: input, shape index: {}]
  %s3 = inlined_call_operand.hbm [shape: bf16[128,128], index: 3, kind: input, shape index: {}]
  %s4 = inlined_call_operand.vmem [shape: f32[1,128], index: 4, kind: input, shape index: {}]
  %s5 = inlined_call_operand.hbm [shape: bf16[128,128], index: 5, kind: input, shape index: {}]
  %s6 = inlined_call_operand.vmem [shape: f32[1,128], index: 6, kind: input, shape index: {}]
  %s7 = inlined_call_operand.vmem [shape: f32[1,128], index: 7, kind: input, shape index: {}]
  %s8 = inlined_call_operand.vmem [shape: f32[1,128], index: 8, kind: input, shape index: {}]
  %s9 = inlined_call_operand.hbm [shape: f32[8,128], index: 9, kind: output, shape index: {}]
  %s10 = sld [smem:[#allocation0]]
  $region62: #{tpu_custom_call.1} parent=0
    _
  %s12 = ssub.s32 1, %s10
  %s13 = scalar_select 0, %s12, %s10
  $region1: #{tpu_custom_call.1} parent=0
    #allocation2 [shape = 'u8[4096]{0}', space=vmem, size = 0x1000, scoped, tag = 'input window, operand 0, single buffered']
    #allocation3 [shape = 's32[1]{0}', space=sflag, size = 0x4, scoped, tag = 'scoped memory for tpu_custom_call.1']
    #allocation4 [shape = 's32[1]{0}', space=sflag, size = 0x4, scoped, tag = 'scoped memory for tpu_custom_call.1']
    #allocation5 [shape = 'u8[4096]{0}', space=vmem, size = 0x1000, scoped, tag = 'input window, operand 1, single buffered']
    #allocation6 [shape = 's32[1]{0}', space=sflag, size = 0x4, scoped, tag = 'scoped memory for tpu_custom_call.1']
    #allocation7 [shape = 'u8[32768]{0}', space=vmem, size = 0x8000, scoped, tag = 'input window, operand 3, single buffered']
    #allocation8 [shape = 'u8[32768]{0}', space=vmem, size = 0x8000, scoped, tag = 'input window, operand 5, single buffered']
    #allocation9 [shape = 's32[1]{0}', space=sflag, size = 0x4, scoped, tag = 'scoped memory for tpu_custom_call.1']
    #allocation10 [shape = 'u8[4096]{0}', space=vmem, size = 0x1000, scoped, tag = 'output window, operand 0, single buffered']
    %14 = vsyncpa [#allocation3], 0
    %15 = vsyncpa [#allocation6], 0
    %16 = vsyncpa [#allocation9], 0
    %17 = vsyncpa [#allocation4], 0
    // Predicated region
    $region2: #{tpu_custom_call.1} parent=1 // pred_check
      _
    $region3: #{tpu_custom_call.1} parent=1 // pred_check_branch
      %19 = sbr.rel (0) target = $region5
    $region4: #{tpu_custom_call.1} parent=1 // pred_region
      %s21 = ssub.s32 128, 128
      %22 = vsyncadd [#allocation3], %s21
      %s24 = sshll.u32 [#allocation2], 4
      %s25 = int_to_ptr.vmem [resolvable:$true] %s24
      %27 = dma.hbm_to_vmem [thread:$0]  %s0, 128, %s25, [#allocation3]
    $region5: #{tpu_custom_call.1} parent=1 // pred_fallthru
      _
    // Predicated region
    $region6: #{tpu_custom_call.1} parent=1 // pred_check
      _
    $region7: #{tpu_custom_call.1} parent=1 // pred_check_branch
      %29 = sbr.rel (0) target = $region9
    $region8: #{tpu_custom_call.1} parent=1 // pred_region
      %s31 = ssub.s32 128, 128
      %32 = vsyncadd [#allocation6], %s31
      %s33 = sshll.u32 [#allocation5], 4
      %s34 = int_to_ptr.vmem [resolvable:$true] %s33
      %39 = dma.hbm_to_vmem [thread:$0]  %s1, 128, %s34, [#allocation6], 64, 64, 4
    $region9: #{tpu_custom_call.1} parent=1 // pred_fallthru
      _
    // Predicated region
    $region10: #{tpu_custom_call.1} parent=1 // pred_check
      _
    $region11: #{tpu_custom_call.1} parent=1 // pred_check_branch
      %41 = sbr.rel (0) target = $region13
    $region12: #{tpu_custom_call.1} parent=1 // pred_region
      _
    $region13: #{tpu_custom_call.1} parent=1 // pred_fallthru
      _
    // Predicated region
    $region14: #{tpu_custom_call.1} parent=1 // pred_check
      _
    $region15: #{tpu_custom_call.1} parent=1 // pred_check_branch
      %43 = sbr.rel (0) target = $region17
    $region16: #{tpu_custom_call.1} parent=1 // pred_region
      %s45 = ssub.s32 1024, 1024
      %46 = vsyncadd [#allocation6], %s45
      %s47 = sshll.u32 [#allocation7], 4
      %s48 = int_to_ptr.vmem [resolvable:$true] %s47
      %53 = dma.hbm_to_vmem [thread:$0]  %s3, 1024, %s48, [#allocation6], 64, 64, 4
    $region17: #{tpu_custom_call.1} parent=1 // pred_fallthru
      _
    // Predicated region
    $region18: #{tpu_custom_call.1} parent=1 // pred_check
      _
    $region19: #{tpu_custom_call.1} parent=1 // pred_check_branch
      %55 = sbr.rel (0) target = $region21
    $region20: #{tpu_custom_call.1} parent=1 // pred_region
      _
    $region21: #{tpu_custom_call.1} parent=1 // pred_fallthru
      _
    // Predicated region
    $region22: #{tpu_custom_call.1} parent=1 // pred_check
      _
    $region23: #{tpu_custom_call.1} parent=1 // pred_check_branch
      %57 = sbr.rel (0) target = $region25
    $region24: #{tpu_custom_call.1} parent=1 // pred_region
      %s59 = ssub.s32 1024, 1024
      %60 = vsyncadd [#allocation9], %s59
      %s61 = sshll.u32 [#allocation8], 4
      %s62 = int_to_ptr.vmem [resolvable:$true] %s61
      %67 = dma.hbm_to_vmem [thread:$0]  %s5, 1024, %s62, [#allocation9], 64, 64, 4
    $region25: #{tpu_custom_call.1} parent=1 // pred_fallthru
      _
    // Predicated region
    $region26: #{tpu_custom_call.1} parent=1 // pred_check
      _
    $region27: #{tpu_custom_call.1} parent=1 // pred_check_branch
      %69 = sbr.rel (0) target = $region29
    $region28: #{tpu_custom_call.1} parent=1 // pred_region
      _
    $region29: #{tpu_custom_call.1} parent=1 // pred_fallthru
      _
    // Predicated region
    $region30: #{tpu_custom_call.1} parent=1 // pred_check
      _
    $region31: #{tpu_custom_call.1} parent=1 // pred_check_branch
      %71 = sbr.rel (0) target = $region33
    $region32: #{tpu_custom_call.1} parent=1 // pred_region
      _
    $region33: #{tpu_custom_call.1} parent=1 // pred_fallthru
      _
    // Predicated region
    $region34: #{tpu_custom_call.1} parent=1 // pred_check
      _
    $region35: #{tpu_custom_call.1} parent=1 // pred_check_branch
      %73 = sbr.rel (0) target = $region37
    $region36: #{tpu_custom_call.1} parent=1 // pred_region
      _
    $region37: #{tpu_custom_call.1} parent=1 // pred_fallthru
      _
    // Predicated region
    $region38: #{tpu_custom_call.1} parent=1 // pred_check
      _
    $region39: #{tpu_custom_call.1} parent=1 // pred_check_branch
      %75 = sbr.rel (0) target = $region41
    $region40: #{tpu_custom_call.1} parent=1 // pred_region
      %76 = dma.done [#allocation3], 128
    $region41: #{tpu_custom_call.1} parent=1 // pred_fallthru
      _
    // Predicated region
    $region42: #{tpu_custom_call.1} parent=1 // pred_check
      _
    $region43: #{tpu_custom_call.1} parent=1 // pred_check_branch
      %78 = sbr.rel (0) target = $region45
    $region44: #{tpu_custom_call.1} parent=1 // pred_region
      %79 = dma.done [#allocation6], 128
    $region45: #{tpu_custom_call.1} parent=1 // pred_fallthru
      _
    // Predicated region
    $region46: #{tpu_custom_call.1} parent=1 // pred_check
      _
    $region47: #{tpu_custom_call.1} parent=1 // pred_check_branch
      %81 = sbr.rel (0) target = $region49
    $region48: #{tpu_custom_call.1} parent=1 // pred_region
      %82 = dma.done [#allocation6], 1024
    $region49: #{tpu_custom_call.1} parent=1 // pred_fallthru
      _
    // Predicated region
    $region50: #{tpu_custom_call.1} parent=1 // pred_check
      _
    $region51: #{tpu_custom_call.1} parent=1 // pred_check_branch
      %84 = sbr.rel (0) target = $region53
    $region52: #{tpu_custom_call.1} parent=1 // pred_region
      %85 = dma.done [#allocation9], 1024
    $region53: #{tpu_custom_call.1} parent=1 // pred_fallthru
      _
    %v87 = vld [vmem:[#allocation2] sm:$0xff]
    %v88 = vpack.c.bf16 %v87, %v87
    %v89 = vld [vmem:[#allocation5] sm:$0xf]
    %v90 = vld [vmem:[#allocation5 + $0x4] sm:$0xf]
    %v91 = vld [vmem:[%s2] sm:$0x1]
    %v93 = vlaneseq
    %v94 = vshrl.u32 %v93, 7
    %v95 = vsub.s32 0, %v94
    %v96 = vrot.slane %v91, %v95
    %v100 = vunpack.c.l.b16 %v89
    %v101 = vunpack.c.l.b16 %v90
    %v102 = vpack.c.b16 %v101, %v100
    %vm104 = vcmask 130048
    %v106 = vsel %vm104, %v88, 0
    %108 = vmatprep.subr.bf16.mxu0 0
    %109 = vmatpush1.bf16.msra.mxu0 %v102
    %110 = vmatprep.subr.bf16.mxu0 0
    %111 = vmatpush1.bf16.msra.mxu0 0
    %112 = vmatprep.subr.bf16.mxu0 0
    %113 = vmatpush1.bf16.msra.mxu0 0
    %114 = vmatprep.subr.bf16.mxu0 0
    %115 = vmatpush1.bf16.msra.mxu0 0
    %116 = vmatprep.subr.bf16.mxu0 0
    %117 = vmatpush1.bf16.msra.mxu0 0
    %118 = vmatprep.subr.bf16.mxu0 0
    %119 = vmatpush1.bf16.msra.mxu0 0
    %120 = vmatprep.subr.bf16.mxu0 0
    %121 = vmatpush1.bf16.msra.mxu0 0
    %122 = vmatprep.subr.bf16.mxu0 0
    %123 = vmatpush1.bf16.msra.mxu0 0
    %124 = vmatprep.subr.bf16.mxu0 0
    %125 = vmatpush1.bf16.msra.mxu0 0
    %126 = vmatprep.subr.bf16.mxu0 0
    %127 = vmatpush1.bf16.msra.mxu0 0
    %128 = vmatprep.subr.bf16.mxu0 0
    %129 = vmatpush1.bf16.msra.mxu0 0
    %130 = vmatprep.subr.bf16.mxu0 0
    %131 = vmatpush1.bf16.msra.mxu0 0
    %132 = vmatprep.subr.bf16.mxu0 0
    %133 = vmatpush1.bf16.msra.mxu0 0
    %134 = vmatprep.subr.bf16.mxu0 0
    %135 = vmatpush1.bf16.msra.mxu0 0
    %136 = vmatprep.subr.bf16.mxu0 0
    %137 = vmatpush1.bf16.msra.mxu0 0
    %138 = vmatprep.subr.bf16.mxu0 0
    %139 = vmatpush1.bf16.msra.mxu0 0
    %140 = vmatprep.mubr.bf16.mxu0 0
    %141 = vmatmul.mubr.bf16.gmra.mrb[0].mxu0 %v106
    %v142 = vpop.f32.mrb[0].mxu0
    %v143 = vadd.f32 %v96, %v142
    %v144 = vpop.f32.mrb[0].mxu0
    %v145 = vpop.f32.mrb[0].mxu0
    %v146 = vpop.f32.mrb[0].mxu0
    %147 = vdwg.mxu0
    %v148 = vmax.f32 %v143, 0.0
    %v149 = vpack.c.bf16 %v148, %v148
    %v150 = vld [vmem:[#allocation7] sm:$0xf]
    %v151 = vld [vmem:[#allocation7 + $0x4] sm:$0xf]
    %v152 = vld [vmem:[#allocation7 + $0x8] sm:$0xf]
    %v153 = vld [vmem:[#allocation7 + $0xc] sm:$0xf]
    %v154 = vld [vmem:[#allocation7 + $0x10] sm:$0xf]
    %v155 = vld [vmem:[#allocation7 + $0x14] sm:$0xf]
    %v156 = vld [vmem:[#allocation7 + $0x18] sm:$0xf]
    %v157 = vld [vmem:[#allocation7 + $0x1c] sm:$0xf]
    %v158 = vld [vmem:[#allocation7 + $0x20] sm:$0xf]
    %v159 = vld [vmem:[#allocation7 + $0x24] sm:$0xf]
    %v160 = vld [vmem:[#allocation7 + $0x28] sm:$0xf]
    %v161 = vld [vmem:[#allocation7 + $0x2c] sm:$0xf]
    %v162 = vld [vmem:[#allocation7 + $0x30] sm:$0xf]
    %v163 = vld [vmem:[#allocation7 + $0x34] sm:$0xf]
    %v164 = vld [vmem:[#allocation7 + $0x38] sm:$0xf]
    %v165 = vld [vmem:[#allocation7 + $0x3c] sm:$0xf]
    %v166 = vld [vmem:[%s4] sm:$0x1]
    %v168 = vlaneseq
    %v169 = vshrl.u32 %v168, 7
    %v170 = vsub.s32 0, %v169
    %v171 = vrot.slane %v166, %v170
    %v189 = vunpack.c.l.b16 %v150
    %v190 = vunpack.c.l.b16 %v151
    %v191 = vunpack.c.l.b16 %v152
    %v192 = vunpack.c.l.b16 %v153
    %v193 = vunpack.c.l.b16 %v154
    %v194 = vunpack.c.l.b16 %v155
    %v195 = vunpack.c.l.b16 %v156
    %v196 = vunpack.c.l.b16 %v157
    %v197 = vunpack.c.l.b16 %v158
    %v198 = vunpack.c.l.b16 %v159
    %v199 = vunpack.c.l.b16 %v160
    %v200 = vunpack.c.l.b16 %v161
    %v201 = vunpack.c.l.b16 %v162
    %v202 = vunpack.c.l.b16 %v163
    %v203 = vunpack.c.l.b16 %v164
    %v204 = vunpack.c.l.b16 %v165
    %v205 = vpack.c.b16 %v190, %v189
    %v206 = vpack.c.b16 %v192, %v191
    %v207 = vpack.c.b16 %v194, %v193
    %v208 = vpack.c.b16 %v196, %v195
    %v209 = vpack.c.b16 %v198, %v197
    %v210 = vpack.c.b16 %v200, %v199
    %v211 = vpack.c.b16 %v202, %v201
    %v212 = vpack.c.b16 %v204, %v203
    %221 = vmatprep.subr.bf16.mxu0 0
    %222 = vmatpush1.bf16.msra.mxu0 %v205
    %223 = vmatprep.subr.bf16.mxu0 0
    %224 = vmatpush1.bf16.msra.mxu0 %v206
    %225 = vmatprep.subr.bf16.mxu0 0
    %226 = vmatpush1.bf16.msra.mxu0 %v207
    %227 = vmatprep.subr.bf16.mxu0 0
    %228 = vmatpush1.bf16.msra.mxu0 %v208
    %229 = vmatprep.subr.bf16.mxu0 0
    %230 = vmatpush1.bf16.msra.mxu0 %v209
    %231 = vmatprep.subr.bf16.mxu0 0
    %232 = vmatpush1.bf16.msra.mxu0 %v210
    %233 = vmatprep.subr.bf16.mxu0 0
    %234 = vmatpush1.bf16.msra.mxu0 %v211
    %235 = vmatprep.subr.bf16.mxu0 0
    %236 = vmatpush1.bf16.msra.mxu0 %v212
    %237 = vmatprep.subr.bf16.mxu0 0
    %238 = vmatpush1.bf16.msra.mxu0 0
    %239 = vmatprep.subr.bf16.mxu0 0
    %240 = vmatpush1.bf16.msra.mxu0 0
    %241 = vmatprep.subr.bf16.mxu0 0
    %242 = vmatpush1.bf16.msra.mxu0 0
    %243 = vmatprep.subr.bf16.mxu0 0
    %244 = vmatpush1.bf16.msra.mxu0 0
    %245 = vmatprep.subr.bf16.mxu0 0
    %246 = vmatpush1.bf16.msra.mxu0 0
    %247 = vmatprep.subr.bf16.mxu0 0
    %248 = vmatpush1.bf16.msra.mxu0 0
    %249 = vmatprep.subr.bf16.mxu0 0
    %250 = vmatpush1.bf16.msra.mxu0 0
    %251 = vmatprep.subr.bf16.mxu0 0
    %252 = vmatpush1.bf16.msra.mxu0 0
    %253 = vmatprep.mubr.bf16.mxu0 0
    %254 = vmatmul.mubr.bf16.gmra.mrb[0].mxu0 %v149
    %v255 = vpop.f32.mrb[0].mxu0
    %v256 = vadd.f32 %v171, %v255
    %v257 = vpop.f32.mrb[0].mxu0
    %v258 = vpop.f32.mrb[0].mxu0
    %v259 = vpop.f32.mrb[0].mxu0
    %260 = vdwg.mxu0
    %v261 = vmax.f32 %v256, 0.0
    %v262 = vpack.c.bf16 %v261, %v261
    %v263 = vld [vmem:[#allocation8] sm:$0xf]
    %v264 = vld [vmem:[#allocation8 + $0x4] sm:$0xf]
    %v265 = vld [vmem:[#allocation8 + $0x8] sm:$0xf]
    %v266 = vld [vmem:[#allocation8 + $0xc] sm:$0xf]
    %v267 = vld [vmem:[#allocation8 + $0x10] sm:$0xf]
    %v268 = vld [vmem:[#allocation8 + $0x14] sm:$0xf]
    %v269 = vld [vmem:[#allocation8 + $0x18] sm:$0xf]
    %v270 = vld [vmem:[#allocation8 + $0x1c] sm:$0xf]
    %v271 = vld [vmem:[#allocation8 + $0x20] sm:$0xf]
    %v272 = vld [vmem:[#allocation8 + $0x24] sm:$0xf]
    %v273 = vld [vmem:[#allocation8 + $0x28] sm:$0xf]
    %v274 = vld [vmem:[#allocation8 + $0x2c] sm:$0xf]
    %v275 = vld [vmem:[#allocation8 + $0x30] sm:$0xf]
    %v276 = vld [vmem:[#allocation8 + $0x34] sm:$0xf]
    %v277 = vld [vmem:[#allocation8 + $0x38] sm:$0xf]
    %v278 = vld [vmem:[#allocation8 + $0x3c] sm:$0xf]
    %v279 = vld [vmem:[%s6] sm:$0x1]
    %v281 = vlaneseq
    %v282 = vshrl.u32 %v281, 7
    %v283 = vsub.s32 0, %v282
    %v284 = vrot.slane %v279, %v283
    %v302 = vunpack.c.l.b16 %v263
    %v303 = vunpack.c.l.b16 %v264
    %v304 = vunpack.c.l.b16 %v265
    %v305 = vunpack.c.l.b16 %v266
    %v306 = vunpack.c.l.b16 %v267
    %v307 = vunpack.c.l.b16 %v268
    %v308 = vunpack.c.l.b16 %v269
    %v309 = vunpack.c.l.b16 %v270
    %v310 = vunpack.c.l.b16 %v271
    %v311 = vunpack.c.l.b16 %v272
    %v312 = vunpack.c.l.b16 %v273
    %v313 = vunpack.c.l.b16 %v274
    %v314 = vunpack.c.l.b16 %v275
    %v315 = vunpack.c.l.b16 %v276
    %v316 = vunpack.c.l.b16 %v277
    %v317 = vunpack.c.l.b16 %v278
    %v318 = vpack.c.b16 %v303, %v302
    %v319 = vpack.c.b16 %v305, %v304
    %v320 = vpack.c.b16 %v307, %v306
    %v321 = vpack.c.b16 %v309, %v308
    %v322 = vpack.c.b16 %v311, %v310
    %v323 = vpack.c.b16 %v313, %v312
    %v324 = vpack.c.b16 %v315, %v314
    %v325 = vpack.c.b16 %v317, %v316
    %334 = vmatprep.subr.bf16.mxu0 0
    %335 = vmatpush1.bf16.msra.mxu0 %v318
    %336 = vmatprep.subr.bf16.mxu0 0
    %337 = vmatpush1.bf16.msra.mxu0 %v319
    %338 = vmatprep.subr.bf16.mxu0 0
    %339 = vmatpush1.bf16.msra.mxu0 %v320
    %340 = vmatprep.subr.bf16.mxu0 0
    %341 = vmatpush1.bf16.msra.mxu0 %v321
    %342 = vmatprep.subr.bf16.mxu0 0
    %343 = vmatpush1.bf16.msra.mxu0 %v322
    %344 = vmatprep.subr.bf16.mxu0 0
    %345 = vmatpush1.bf16.msra.mxu0 %v323
    %346 = vmatprep.subr.bf16.mxu0 0
    %347 = vmatpush1.bf16.msra.mxu0 %v324
    %348 = vmatprep.subr.bf16.mxu0 0
    %349 = vmatpush1.bf16.msra.mxu0 %v325
    %350 = vmatprep.subr.bf16.mxu0 0
    %351 = vmatpush1.bf16.msra.mxu0 0
    %352 = vmatprep.subr.bf16.mxu0 0
    %353 = vmatpush1.bf16.msra.mxu0 0
    %354 = vmatprep.subr.bf16.mxu0 0
    %355 = vmatpush1.bf16.msra.mxu0 0
    %356 = vmatprep.subr.bf16.mxu0 0
    %357 = vmatpush1.bf16.msra.mxu0 0
    %358 = vmatprep.subr.bf16.mxu0 0
    %359 = vmatpush1.bf16.msra.mxu0 0
    %360 = vmatprep.subr.bf16.mxu0 0
    %361 = vmatpush1.bf16.msra.mxu0 0
    %362 = vmatprep.subr.bf16.mxu0 0
    %363 = vmatpush1.bf16.msra.mxu0 0
    %364 = vmatprep.subr.bf16.mxu0 0
    %365 = vmatpush1.bf16.msra.mxu0 0
    %366 = vmatprep.mubr.bf16.mxu0 0
    %367 = vmatmul.mubr.bf16.gmra.mrb[0].mxu0 %v262
    %v368 = vpop.f32.mrb[0].mxu0
    %v369 = vadd.f32 %v284, %v368
    %v370 = vpop.f32.mrb[0].mxu0
    %v371 = vpop.f32.mrb[0].mxu0
    %v372 = vpop.f32.mrb[0].mxu0
    %373 = vdwg.mxu0
    %v374 = vld [vmem:[%s7] sm:$0x1]
    %v376 = vlaneseq
    %v377 = vshrl.u32 %v376, 7
    %v378 = vsub.s32 0, %v377
    %v379 = vrot.slane %v374, %v378
    %v381 = vmax.f32 %v369, %v379
    %v382 = vld [vmem:[%s8] sm:$0x1]
    %v384 = vlaneseq
    %v385 = vshrl.u32 %v384, 7
    %v386 = vsub.s32 0, %v385
    %v387 = vrot.slane %v382, %v386
    %v389 = vmin.f32 %v381, %v387
    %390 = vst [vmem:[#allocation10] sm:$0xff] %v389
    // Predicated region
    $region54: #{tpu_custom_call.1} parent=1 // pred_check
      _
    $region55: #{tpu_custom_call.1} parent=1 // pred_check_branch
      %392 = sbr.rel (0) target = $region57
    $region56: #{tpu_custom_call.1} parent=1 // pred_region
      %s394 = ssub.s32 128, 128
      %395 = vsyncadd [#allocation4], %s394
      %s397 = sshll.u32 [#allocation10], 4
      %s398 = int_to_ptr.vmem [resolvable:$true] %s397
      %400 = dma.vmem_to_hbm [thread:$0]  %s398, 128, %s9, [#allocation4]
    $region57: #{tpu_custom_call.1} parent=1 // pred_fallthru
      _
    // Predicated region
    $region58: #{tpu_custom_call.1} parent=1 // pred_check
      _
    $region59: #{tpu_custom_call.1} parent=1 // pred_check_branch
      %402 = sbr.rel (0) target = $region61
    $region60: #{tpu_custom_call.1} parent=1 // pred_region
      %403 = dma.done [#allocation4], 128
    $region61: #{tpu_custom_call.1} parent=1 // pred_fallthru
      _
    %404 = vsyncpa [#allocation3], 1
    %405 = vsyncpa [#allocation6], 1
    %406 = vsyncpa [#allocation9], 1
    %407 = vsyncpa [#allocation4], 1

</llo_original>
